<compile_context>
chip_gen: v6e
topology: v6e:2x2x1
jax: 0.10.0
libtpu: 0.0.40
codegen_flags: <defaults>
</compile_context>

<pallas_src>
import jax
import jax.numpy as jnp
from jax.experimental import pallas as pl
from jax.experimental.pallas import tpu as pltpu

_LANES = 128
_SUBLANES = 8
_ALIGN = _SUBLANES * _LANES              # 1024-element alignment for the bulk
_TARGET_BLOCK_BYTES = 2 * 1024 * 1024    # 2 MiB per input block


def _max_block_rows(itemsize):
    rows = _TARGET_BLOCK_BYTES // (_LANES * max(1, int(itemsize)))
    rows = (rows // _SUBLANES) * _SUBLANES
    return max(_SUBLANES, rows)


def _num_tensorcores():
    """Best-effort TensorCore count (2 on v7x, 1 on v5e/v6e). Defaults to 1."""
    try:
        info = pltpu.get_tpu_info()
    except Exception:
        return 1
    for attr in ("num_cores", "core_count", "tensorcore_count",
                 "num_tensorcores", "cores_per_chip"):
        v = getattr(info, attr, None)
        if isinstance(v, int) and v >= 1:
            return v
    return 1


def _make_kernel(rows, block_rows, blocks_per_core, full_blocks,
                 need_count, needs_mask):
    """Builds the kernel body; static config baked in via closure."""
    groups = block_rows // _SUBLANES

    def kernel(pred_ref, rating_ref, *acc_refs):
        i = pl.program_id(1)

        # Zero the resident per-core (8,128) accumulator(s) on the first step.
        @pl.when(i == 0)
        def _():
            for acc in acc_refs:
                acc[...] = jnp.zeros_like(acc)

        p = pred_ref[...].astype(jnp.float32)
        r = rating_ref[...].astype(jnp.float32)

        def accumulate(d, obs):
            sq = (d * d).reshape(groups, _SUBLANES, _LANES)
            acc_refs[0][0] += jnp.sum(sq, axis=0)
            if need_count:
                o = obs.reshape(groups, _SUBLANES, _LANES)
                acc_refs[1][0] += jnp.sum(o, axis=0)

        def interior():
            # Full in-range block: no row-validity mask needed.
            if need_count:
                obs = (r != 0.0).astype(jnp.float32)
                accumulate(p * obs - r, obs)
            else:
                accumulate(jnp.where(r != 0.0, p, 0.0) - r, None)

        if not needs_mask:
            interior()
        else:
            # Logical (unclamped) block index -> detect the ragged last block
            # and/or the duplicated clamped block of the second core.
            block_idx = pl.program_id(0) * blocks_per_core + i
            is_interior = block_idx < full_blocks

            @pl.when(is_interior)
            def _():
                interior()

            @pl.when(jnp.logical_not(is_interior))
            def _():
                # Mask rows beyond the real array; padded/duplicated data
                # (possibly garbage/NaN) contributes exactly zero.
                row_ids = block_idx * block_rows + jax.lax.broadcasted_iota(
                    jnp.int32, (block_rows, _LANES), 0)
                valid = row_ids < rows
                obs_b = jnp.logical_and(valid, r != 0.0)
                d = jnp.where(obs_b, p, 0.0) - jnp.where(valid, r, 0.0)
                accumulate(d, obs_b.astype(jnp.float32) if need_count else None)

    return kernel


def _bulk_sse_and_count(pred2d, rating2d, need_count, force_cores=None):
    """Pallas reduction over the 1024-aligned (rows, 128) bulk."""
    rows = pred2d.shape[0]
    itemsize = max(pred2d.dtype.itemsize, rating2d.dtype.itemsize)
    block_rows = min(_max_block_rows(itemsize), rows)
    n_blocks = pl.cdiv(rows, block_rows)

    if force_cores is not None:
        num_cores = max(1, min(int(force_cores), n_blocks))
    elif n_blocks >= 2 and (n_blocks % 2 == 0 or _num_tensorcores() >= 2):
        # Even split is free on single-TC chips (no duplicated block) and
        # engages both TensorCores on v7x; odd splits only if the chip
        # actually has 2 TCs.
        num_cores = 2
    else:
        num_cores = 1

    blocks_per_core = pl.cdiv(n_blocks, num_cores)
    last_block = n_blocks - 1
    full_blocks = rows // block_rows
    has_duplicate = num_cores * blocks_per_core > n_blocks
    needs_mask = (rows % block_rows != 0) or has_duplicate

    def in_map(c, i):
        # Clamp so the DMA window stays in-bounds; the kernel's edge branch
        # zeroes any duplicated / out-of-range contribution.
        return (jnp.minimum(c * blocks_per_core + i, last_block), 0)

    def out_map(c, i):
        return (c, 0, 0)

    n_out = 2 if need_count else 1
    out_shape = tuple(
        jax.ShapeDtypeStruct((num_cores, _SUBLANES, _LANES), jnp.float32)
        for _ in range(n_out))
    out_specs = tuple(
        pl.BlockSpec((1, _SUBLANES, _LANES), out_map) for _ in range(n_out))

    kernel = _make_kernel(rows, block_rows, blocks_per_core, full_blocks,
                          need_count, needs_mask)

    in_bytes = (pred2d.size * pred2d.dtype.itemsize
                + rating2d.size * rating2d.dtype.itemsize)
    out_bytes = n_out * num_cores * _SUBLANES * _LANES * 4

    outs = pl.pallas_call(
        kernel,
        out_shape=out_shape,
        grid_spec=pl.GridSpec(
            grid=(num_cores, blocks_per_core),
            in_specs=[
                pl.BlockSpec((block_rows, _LANES), in_map),
                pl.BlockSpec((block_rows, _LANES), in_map),
            ],
            out_specs=out_specs,
        ),
        compiler_params=pltpu.CompilerParams(
            dimension_semantics=("parallel", "arbitrary"),
            vmem_limit_bytes=32 * 1024 * 1024,
        ),
        cost_estimate=pl.CostEstimate(
            flops=6 * pred2d.size,
            transcendentals=0,
            bytes_accessed=in_bytes + out_bytes,
        ),
    )(pred2d, rating2d)

    sse = jnp.sum(outs[0])
    cnt = jnp.sum(outs[1]) if need_count else None
    return sse, cnt


def _masked_sse_and_count(pred, rating, need_count):
    """Returns (sum of squared masked error, number of observed ratings)."""
    assert pred.shape == rating.shape, "pred and rating must have equal shapes"
    n = pred.size
    pred_flat = jnp.ravel(pred)
    rating_flat = jnp.ravel(rating)

    n_bulk = (n // _ALIGN) * _ALIGN
    sse = jnp.float32(0.0)
    cnt = jnp.float32(0.0)

    if n_bulk > 0:
        rows = n_bulk // _LANES
        pred2d = pred_flat[:n_bulk].reshape(rows, _LANES)
        rating2d = rating_flat[:n_bulk].reshape(rows, _LANES)
        sse_b, cnt_b = _bulk_sse_and_count(pred2d, rating2d, need_count)
        sse = sse + sse_b
        if need_count:
            cnt = cnt + cnt_b

    if n_bulk < n:
        # <1024-element ragged tail in plain JAX (avoids a full-array
        # concatenate/pad copy in HBM).
        tp = pred_flat[n_bulk:].astype(jnp.float32)
        tr = rating_flat[n_bulk:].astype(jnp.float32)
        m = (tr != 0.0).astype(jnp.float32)
        td = tp * m - tr
        sse = sse + jnp.sum(td * td)
        if need_count:
            cnt = cnt + jnp.sum(m)

    return sse, cnt


def mrmse_loss(pred, rating, reduction="sum"):
    """JAX/Pallas equivalent of MRMSELoss.forward."""
    need_count = (reduction == "mean")
    sse, cnt = _masked_sse_and_count(pred, rating, need_count)
    if reduction == "sum":
        # num_observed = Tensor([1.0]) in the reference -> shape (1,) output.
        return jnp.sqrt(sse)[None]
    # reduction == 'mean': MSE over all elements, divided by #observed.
    # (cnt == 0 yields inf/nan, matching the PyTorch module's behavior.)
    mse = sse / jnp.float32(pred.size)
    return jnp.sqrt(mse / cnt)


if __name__ == "__main__":
    def ref_loss(pred, rating, reduction="sum"):
        mask = (rating != 0).astype(jnp.float32)
        sq = (pred.astype(jnp.float32) * mask - rating.astype(jnp.float32)) ** 2
        if reduction == "sum":
            return jnp.sqrt(jnp.sum(sq) / 1.0)[None]
        return jnp.sqrt(jnp.mean(sq) / jnp.sum(mask))

    def make_inputs(key, shape, p_obs=0.4):
        k1, k2, k3 = jax.random.split(key, 3)
        pred = jax.random.normal(k1, shape, dtype=jnp.float32)
        rating = jax.random.uniform(k2, shape, minval=1.0, maxval=5.0)
        observed = jax.random.bernoulli(k3, p=p_obs, shape=shape)
        rating = rating * observed.astype(jnp.float32)
        return pred, rating

    key = jax.random.PRNGKey(0)
    k0, k1, k2, k3 = jax.random.split(key, 4)

    # Primary case: small 4D rating tensor, reduction='sum' (module default).
    pred, rating = make_inputs(k0, (2, 4, 16, 16))
    loss = mrmse_loss(pred, rating, reduction="sum")
    jax.block_until_ready(loss)
    ref = ref_loss(pred, rating, "sum")
    assert loss.shape == (1,)
    assert jnp.allclose(loss, ref, rtol=1e-5, atol=1e-5), (loss, ref)

    # 'mean' path (exercises the observed-count accumulator).
    loss_m = mrmse_loss(pred, rating, reduction="mean")
    ref_m = ref_loss(pred, rating, "mean")
    assert jnp.allclose(loss_m, ref_m, rtol=1e-5, atol=1e-5), (loss_m, ref_m)

    # Ragged case: non-1024-aligned element count (Pallas bulk + JAX tail).
    pred_r, rating_r = make_inputs(k1, (3, 5, 7, 11))
    loss_r = mrmse_loss(pred_r, rating_r, reduction="sum")
    ref_r = ref_loss(pred_r, rating_r, "sum")
    assert jnp.allclose(loss_r, ref_r, rtol=1e-5, atol=1e-5), (loss_r, ref_r)

    # Multi-block case: even block count -> 2-way 'parallel' split with no
    # duplicated block, plus a partially-masked ragged last block.
    pred_b, rating_b = make_inputs(k2, (4, 4, 160, 208))
    loss_b = mrmse_loss(pred_b, rating_b, reduction="sum")
    ref_b = ref_loss(pred_b, rating_b, "sum")
    assert jnp.allclose(loss_b, ref_b, rtol=1e-5, atol=1e-5), (loss_b, ref_b)

    # Forced 2-core split with an odd block count: exercises the clamped
    # duplicate-block path and the edge-block mask (both accumulators).
    pred_o, rating_o = make_inputs(k3, (10240, 128))
    sse_o, cnt_o = _bulk_sse_and_count(pred_o, rating_o, True, force_cores=2)
    m_o = (rating_o != 0).astype(jnp.float32)
    sse_ref = jnp.sum((pred_o * m_o - rating_o) ** 2)
    cnt_ref = jnp.sum(m_o)
    assert jnp.allclose(sse_o, sse_ref, rtol=1e-5, atol=1e-4), (sse_o, sse_ref)
    assert jnp.allclose(cnt_o, cnt_ref, rtol=1e-6, atol=0.5), (cnt_o, cnt_ref)

    jax.block_until_ready((loss, loss_m, loss_r, loss_b, sse_o, cnt_o))
    print("KERNEL_OK")
</pallas_src>

<mosaic_0001>
module attributes {stable_mosaic.version = 11 : i64} {
  func.func @kernel(%arg0: i32, %arg1: i32, %arg2: memref<16x128xf32, #tpu.memory_space<vmem>>, %arg3: memref<16x128xf32, #tpu.memory_space<vmem>>, %arg4: memref<1x8x128xf32, #tpu.memory_space<vmem>>) attributes {dimension_semantics = [#tpu.dimension_semantics<parallel>, #tpu.dimension_semantics<arbitrary>], iteration_bounds = array<i64: 1, 1>, scalar_prefetch = 0 : i64, scratch_operands = 0 : i64, tpu.core_type = #tpu.core_type<tc>, window_params = [{transform_indices = @transform_0, window_bounds = array<i64: 16, 128>}, {transform_indices = @transform_1, window_bounds = array<i64: 16, 128>}, {transform_indices = @transform_2, window_bounds = array<i64: 1, 8, 128>}]} {
    %c0_i32 = arith.constant 0 : i32
    %0 = arith.cmpi eq, %arg1, %c0_i32 : i32
    %1 = arith.extui %0 : i1 to i32
    %c0_i32_0 = arith.constant 0 : i32
    %2 = arith.cmpi ne, %1, %c0_i32_0 : i32
    scf.if %2 {
      %cst_12 = arith.constant 0.000000e+00 : f32
      %19 = vector.broadcast %cst_12 : f32 to vector<1x8x128xf32>
      %c0_13 = arith.constant 0 : index
      %c0_14 = arith.constant 0 : index
      %c0_15 = arith.constant 0 : index
      %20 = vector.load %arg4[%c0_13, %c0_14, %c0_15] : memref<1x8x128xf32, #tpu.memory_space<vmem>>, vector<1x8x128xf32>
      tpu.vector_store %arg4[%c0_13, %c0_14, %c0_15], %19 {strides = array<i32>} : memref<1x8x128xf32, #tpu.memory_space<vmem>>, vector<1x8x128xf32>,
    } else {
    }
    %c0 = arith.constant 0 : index
    %c0_1 = arith.constant 0 : index
    %3 = vector.load %arg2[%c0, %c0_1] : memref<16x128xf32, #tpu.memory_space<vmem>>, vector<16x128xf32>
    %c0_2 = arith.constant 0 : index
    %c0_3 = arith.constant 0 : index
    %4 = vector.load %arg3[%c0_2, %c0_3] : memref<16x128xf32, #tpu.memory_space<vmem>>, vector<16x128xf32>
    %cst = arith.constant 0.000000e+00 : f32
    %5 = vector.broadcast %cst : f32 to vector<16x128xf32>
    %6 = arith.cmpf one, %4, %5 : vector<16x128xf32>
    %cst_4 = arith.constant 0.000000e+00 : f32
    %7 = vector.broadcast %cst_4 : f32 to vector<16x128xf32>
    %8 = arith.select %6, %3, %7 : vector<16x128xi1>, vector<16x128xf32>
    %9 = arith.subf %8, %4 : vector<16x128xf32>
    %10 = arith.mulf %9, %9 : vector<16x128xf32>
    %11 = vector.shape_cast %10 : vector<16x128xf32> to vector<2x8x128xf32>
    %c0_5 = arith.constant 0 : index
    %c0_6 = arith.constant 0 : index
    %c0_7 = arith.constant 0 : index
    %12 = vector.load %arg4[%c0_5, %c0_6, %c0_7] : memref<1x8x128xf32, #tpu.memory_space<vmem>>, vector<1x8x128xf32>
    %13 = vector.shape_cast %12 : vector<1x8x128xf32> to vector<8x128xf32>
    %cst_8 = arith.constant dense<0.000000e+00> : vector<8x128xf32>
    %14 = vector.multi_reduction <add>, %11, %cst_8 [0] : vector<2x8x128xf32> to vector<8x128xf32>
    %15 = arith.addf %13, %14 : vector<8x128xf32>
    %c0_9 = arith.constant 0 : index
    %c0_10 = arith.constant 0 : index
    %c0_11 = arith.constant 0 : index
    %16 = vector.load %arg4[%c0_9, %c0_10, %c0_11] : memref<1x8x128xf32, #tpu.memory_space<vmem>>, vector<1x8x128xf32>
    %17 = vector.shape_cast %16 : vector<1x8x128xf32> to vector<8x128xf32>
    %18 = vector.shape_cast %15 : vector<8x128xf32> to vector<1x8x128xf32>
    tpu.vector_store %arg4[%c0_9, %c0_10, %c0_11], %18 {strides = array<i32>} : memref<1x8x128xf32, #tpu.memory_space<vmem>>, vector<1x8x128xf32>,
    return
  }
  func.func @transform_0(%arg0: i32, %arg1: i32) -> (i32, i32) {
    %c1_i32 = arith.constant 1 : i32
    %0 = arith.muli %arg0, %c1_i32 : i32
    %1 = arith.addi %0, %arg1 : i32
    %c0_i32 = arith.constant 0 : i32
    %2 = arith.minsi %1, %c0_i32 : i32
    %c0_i32_0 = arith.constant 0 : i32
    %c0_i32_1 = arith.constant 0 : i32
    return %2, %c0_i32_0 : i32, i32
  }
  func.func @transform_1(%arg0: i32, %arg1: i32) -> (i32, i32) {
    %c1_i32 = arith.constant 1 : i32
    %0 = arith.muli %arg0, %c1_i32 : i32
    %1 = arith.addi %0, %arg1 : i32
    %c0_i32 = arith.constant 0 : i32
    %2 = arith.minsi %1, %c0_i32 : i32
    %c0_i32_0 = arith.constant 0 : i32
    %c0_i32_1 = arith.constant 0 : i32
    return %2, %c0_i32_0 : i32, i32
  }
  func.func @transform_2(%arg0: i32, %arg1: i32) -> (i32, i32, i32) {
    %c0_i32 = arith.constant 0 : i32
    %c0_i32_0 = arith.constant 0 : i32
    %c0_i32_1 = arith.constant 0 : i32
    return %arg0, %c0_i32, %c0_i32_0 : i32, i32, i32
  }
}

</mosaic_0001>

<llo_original>
// kernel: tpu_custom_call.1
$region0: #{tpu_custom_call.1}
  #allocation0 [shape = 'u32[]', space=smem, size = 0x4, offset = 0x4, fixed_abs, tag = 'smem constant byte address 0x4 - core index']
  #allocation1 [shape = 'u32[144,128]{1,0:T(1,128)}', space=vmem, size = 0x12000, scoped, tag = 'internal scratch']
  %s0 = inlined_call_operand.hbm [shape: f32[16,128], index: 0, kind: input, shape index: {}]
  %s1 = inlined_call_operand.hbm [shape: f32[16,128], index: 1, kind: input, shape index: {}]
  %s2 = inlined_call_operand.hbm [shape: f32[1,8,128], index: 2, kind: output, shape index: {}]
  %s3 = sld [smem:[#allocation0]]
  $region30: #{tpu_custom_call.1} parent=0
    _
  %s5 = ssub.s32 1, %s3
  %s6 = scalar_select 0, %s5, %s3
  $region1: #{tpu_custom_call.1} parent=0
    #allocation2 [shape = 'u8[8192]{0}', space=vmem, size = 0x2000, scoped, tag = 'input window, operand 0, single buffered']
    #allocation3 [shape = 's32[1]{0}', space=sflag, size = 0x4, scoped, tag = 'scoped memory for tpu_custom_call.1']
    #allocation4 [shape = 's32[1]{0}', space=sflag, size = 0x4, scoped, tag = 'scoped memory for tpu_custom_call.1']
    #allocation5 [shape = 'u8[8192]{0}', space=vmem, size = 0x2000, scoped, tag = 'input window, operand 1, single buffered']
    #allocation6 [shape = 's32[1]{0}', space=sflag, size = 0x4, scoped, tag = 'scoped memory for tpu_custom_call.1']
    #allocation7 [shape = 'u8[4096]{0}', space=vmem, size = 0x1000, scoped, tag = 'output window, operand 0, single buffered']
    %7 = vsyncpa [#allocation3], 0
    %8 = vsyncpa [#allocation6], 0
    %9 = vsyncpa [#allocation4], 0
    // Predicated region
    $region2: #{tpu_custom_call.1} parent=1 // pred_check
      _
    $region3: #{tpu_custom_call.1} parent=1 // pred_check_branch
      %11 = sbr.rel (0) target = $region5
    $region4: #{tpu_custom_call.1} parent=1 // pred_region
      %s12 = sadd.s32 0, 0
      %p13 = scmp.lt.s32.totalorder %s12, 0
      %s14 = scalar_select %p13, %s12, 0
      %s15 = smul.u32 2, %s14
      %s17 = ssub.s32 256, 256
      %18 = vsyncadd [#allocation3], %s17
      %s19 = smul.addr %s15, 128
      %s20 = scalar_lea.hbm %s0, %s19
      %s21 = sshll.u32 [#allocation2], 4
      %s22 = int_to_ptr.vmem [resolvable:$true] %s21
      %27 = dma.hbm_to_vmem [thread:$0]  %s20, 256, %s22, [#allocation3], 128, 128, 8
    $region5: #{tpu_custom_call.1} parent=1 // pred_fallthru
      _
    // Predicated region
    $region6: #{tpu_custom_call.1} parent=1 // pred_check
      _
    $region7: #{tpu_custom_call.1} parent=1 // pred_check_branch
      %29 = sbr.rel (0) target = $region9
    $region8: #{tpu_custom_call.1} parent=1 // pred_region
      %s30 = sadd.s32 0, 0
      %p31 = scmp.lt.s32.totalorder %s30, 0
      %s32 = scalar_select %p31, %s30, 0
      %s33 = smul.u32 2, %s32
      %s35 = ssub.s32 256, 256
      %36 = vsyncadd [#allocation6], %s35
      %s37 = smul.addr %s33, 128
      %s38 = scalar_lea.hbm %s1, %s37
      %s39 = sshll.u32 [#allocation5], 4
      %s40 = int_to_ptr.vmem [resolvable:$true] %s39
      %45 = dma.hbm_to_vmem [thread:$0]  %s38, 256, %s40, [#allocation6], 128, 128, 8
    $region9: #{tpu_custom_call.1} parent=1 // pred_fallthru
      _
    // Predicated region
    $region10: #{tpu_custom_call.1} parent=1 // pred_check
      _
    $region11: #{tpu_custom_call.1} parent=1 // pred_check_branch
      %47 = sbr.rel (0) target = $region13
    $region12: #{tpu_custom_call.1} parent=1 // pred_region
      %48 = dma.done [#allocation3], 256
    $region13: #{tpu_custom_call.1} parent=1 // pred_fallthru
      _
    // Predicated region
    $region14: #{tpu_custom_call.1} parent=1 // pred_check
      _
    $region15: #{tpu_custom_call.1} parent=1 // pred_check_branch
      %50 = sbr.rel (0) target = $region17
    $region16: #{tpu_custom_call.1} parent=1 // pred_region
      %51 = dma.done [#allocation6], 256
    $region17: #{tpu_custom_call.1} parent=1 // pred_fallthru
      _
    %s52 = sadd.s32 0, 0
    %p53 = scmp.lt.s32.totalorder %s52, 0
    %s54 = scalar_select %p53, %s52, 0
    %s55 = smul.u32 2, %s54
    %s56 = sadd.s32 0, 0
    %p57 = scmp.lt.s32.totalorder %s56, 0
    %s58 = scalar_select %p57, %s56, 0
    %s59 = smul.u32 2, %s58
    %p60 = scmp.eq.s32.totalorder 0, 0
    // Predicated region
    $region18: #{tpu_custom_call.1} parent=1 // pred_check
      %p61 = pneg %p60
    $region19: #{tpu_custom_call.1} parent=1 // pred_check_branch
      %63 = sbr.rel (%p61) target = $region21
    $region20: #{tpu_custom_call.1} parent=1 // pred_region
      %64 = vst [vmem:[#allocation7] sm:$0xff] 0.0
    $region21: #{tpu_custom_call.1} parent=1 // pred_fallthru
      _
    %v65 = vld [vmem:[#allocation2] sm:$0xff]
    %v66 = vld [vmem:[#allocation2 + $0x8] sm:$0xff]
    %v67 = vld [vmem:[#allocation5] sm:$0xff]
    %v68 = vld [vmem:[#allocation5 + $0x8] sm:$0xff]
    %vm69 = vcmp.ne.f32.partialorder %v67, 0.0
    %vm70 = vcmp.ne.f32.partialorder %v68, 0.0
    %v71 = vsel %vm69, %v65, 0.0
    %v72 = vsel %vm70, %v66, 0.0
    %v73 = vsub.f32 %v71, %v67
    %v74 = vsub.f32 %v72, %v68
    %v75 = vmul.f32 %v73, %v73
    %v76 = vmul.f32 %v74, %v74
    %v77 = vld [vmem:[#allocation7] sm:$0xff]
    %v78 = vadd.f32 %v75, %v76
    %v79 = vadd.f32 %v77, %v78
    %80 = vst [vmem:[#allocation7] sm:$0xff] %v79
    // Predicated region
    $region22: #{tpu_custom_call.1} parent=1 // pred_check
      _
    $region23: #{tpu_custom_call.1} parent=1 // pred_check_branch
      %82 = sbr.rel (0) target = $region25
    $region24: #{tpu_custom_call.1} parent=1 // pred_region
      %s84 = ssub.s32 128, 128
      %85 = vsyncadd [#allocation4], %s84
      %s87 = sshll.u32 [#allocation7], 4
      %s88 = int_to_ptr.vmem [resolvable:$true] %s87
      %90 = dma.vmem_to_hbm [thread:$0]  %s88, 128, %s2, [#allocation4]
    $region25: #{tpu_custom_call.1} parent=1 // pred_fallthru
      _
    // Predicated region
    $region26: #{tpu_custom_call.1} parent=1 // pred_check
      _
    $region27: #{tpu_custom_call.1} parent=1 // pred_check_branch
      %92 = sbr.rel (0) target = $region29
    $region28: #{tpu_custom_call.1} parent=1 // pred_region
      %93 = dma.done [#allocation4], 128
    $region29: #{tpu_custom_call.1} parent=1 // pred_fallthru
      _
    %94 = vsyncpa [#allocation3], 1
    %95 = vsyncpa [#allocation6], 1
    %96 = vsyncpa [#allocation4], 1

</llo_original>
